<compile_context>
chip_gen: v7x
topology: tpu7x:2x2x1
jax: 0.10.0
libtpu: 0.0.40
codegen_flags: <defaults>
</compile_context>

<pallas_src>
import functools

import jax
import jax.numpy as jnp
from jax.experimental import pallas as pl
from jax.experimental.pallas import tpu as pltpu


def _round_up(n: int, m: int) -> int:
    return ((n + m - 1) // m) * m


def _parametric_affine_kernel(d_ref, wa_ref, ba_ref, w2_ref, b2_ref, out_ref):
    """Fused coupling step on one lane-dense folded batch tile.

    d_ref  : (tb, CF)    folded data tile (CF = fold*C = 128 lanes at C=32)
    wa_ref : (CF, CF)    block-diag lina weights (y rows zeroed)
    ba_ref : (1, CF)     tiled lina bias
    w2_ref : (CF, 3*CF)  fused (pos|neg|add) weights, gated, placed on y lanes
    b2_ref : (1, 3*CF)   fused biases, gated, placed on y lanes
    out_ref: (tb, CF)
    """
    cf = wa_ref.shape[0]
    d = d_ref[...]

    # lina: relu -> matmul -> bias -> relu.  The y-lane rows of wa_ref are
    # zero, so relu(d) @ wa_ref only picks up the x half of each sub-row.
    h = jnp.maximum(d, 0.0)
    h = jnp.dot(h, wa_ref[...], preferred_element_type=jnp.float32) + ba_ref[...]
    h = jnp.maximum(h, 0.0)

    # posmults / negmults / adds fused into a single MXU pass; gates are
    # already folded into w2/b2.  Slices below are at 128-lane boundaries.
    o2 = jnp.dot(h, w2_ref[...], preferred_element_type=jnp.float32) + b2_ref[...]
    posm = o2[:, 0 * cf:1 * cf]
    negm = o2[:, 1 * cf:2 * cf]
    add = o2[:, 2 * cf:3 * cf]

    # makemult + affine update.  On x lanes posm == negm == add == 0 by
    # construction, so this single expression is the exact identity there and
    # y * exp(m) + a on the y lanes: one dense full-width store, no concat.
    m = jnp.where(d >= 0.0, posm, negm)
    out_ref[...] = (d * jnp.exp(m) + add).astype(out_ref.dtype)


@functools.partial(jax.jit, static_argnames=("tile_rows",))
def parametric_affine_forward(data: jax.Array, params: dict, *, tile_rows: int = 1024):
    """Fused Parametric_Affine forward as one batch-tiled Pallas kernel.

    `tile_rows` counts FOLDED (128-lane) rows: 1024 folded rows = 4096
    original rows at C=32 (0.5 MiB per in/out tile).
    """
    B, C = data.shape
    ch = C // 2
    f32 = jnp.float32

    # Lane fold: pack `fold` consecutive batch rows into one 128-lane row.
    fold = 128 // C if (C <= 128 and 128 % C == 0) else 1
    CF = fold * C

    # ---- one-off parameter expansion (tiny tensors) -------------------------
    wa = params["wa"].astype(f32)                      # (ch, C)
    ba = params["ba"].astype(f32)                      # (C,)
    pg = params["pg"].astype(f32)                      # (ch,)
    ng = params["ng"].astype(f32)
    wp = params["wp"].astype(f32) * pg[None, :]        # gate folded into W/b
    bp = params["bp"].astype(f32) * pg
    wn = params["wn"].astype(f32) * ng[None, :]
    bn = params["bn"].astype(f32) * ng
    wd = params["wadd"].astype(f32)
    bd = params["badd"].astype(f32)

    eye_f = jnp.eye(fold, dtype=f32)

    # lina: only the x rows of each C-wide sub-block carry weights.
    wa_pad = jnp.concatenate([wa, jnp.zeros((C - ch, C), f32)], axis=0)   # (C, C)
    wa_big = jnp.kron(eye_f, wa_pad)                                      # (CF, CF)
    ba_big = jnp.tile(ba, fold).reshape(1, CF)

    def place_on_y_lanes(w, b):
        # (C, ch) weight / (ch,) bias -> outputs land on the y lanes of each
        # C-wide sub-block, exact zeros on the x lanes.
        w_pad = jnp.concatenate([jnp.zeros((C, ch), f32), w], axis=1)     # (C, C)
        b_pad = jnp.concatenate([jnp.zeros((ch,), f32), b])               # (C,)
        return jnp.kron(eye_f, w_pad), jnp.tile(b_pad, fold)

    wp_big, bp_big = place_on_y_lanes(wp, bp)
    wn_big, bn_big = place_on_y_lanes(wn, bn)
    wd_big, bd_big = place_on_y_lanes(wd, bd)
    w2_big = jnp.concatenate([wp_big, wn_big, wd_big], axis=1)            # (CF, 3CF)
    b2_big = jnp.concatenate([bp_big, bn_big, bd_big]).reshape(1, 3 * CF)

    # ---- fold + pad the batch ------------------------------------------------
    b_rows = -(-B // fold)                        # folded rows needed
    tb = min(tile_rows, _round_up(b_rows, 8))     # >= 8 sublanes per tile
    rows_pad = _round_up(b_rows, tb)
    b_pad = rows_pad * fold
    d = jnp.pad(data, ((0, b_pad - B), (0, 0))) if b_pad != B else data
    d_fold = d.reshape(rows_pad, CF)              # free row-major reshape

    def resident(arr):
        # Small parameter tensor: whole-array block with a constant index map
        # -> DMA'd once, stays resident in VMEM across the whole grid.
        return pl.BlockSpec(arr.shape, lambda i: (0, 0))

    out_fold = pl.pallas_call(
        _parametric_affine_kernel,
        out_shape=jax.ShapeDtypeStruct((rows_pad, CF), data.dtype),
        grid=(rows_pad // tb,),
        in_specs=[
            pl.BlockSpec((tb, CF), lambda i: (i, 0)),   # folded data tile
            resident(wa_big), resident(ba_big),
            resident(w2_big), resident(b2_big),
        ],
        out_specs=pl.BlockSpec((tb, CF), lambda i: (i, 0)),
        compiler_params=pltpu.CompilerParams(
            dimension_semantics=("parallel",),
            vmem_limit_bytes=32 * 1024 * 1024,
        ),
    )(d_fold, wa_big, ba_big, w2_big, b2_big)

    out = out_fold.reshape(b_pad, C)
    return out[:B] if b_pad != B else out


# ----------------------------- reference & demo ------------------------------

def parametric_affine_ref(data, p):
    """Plain-JAX reference matching the PyTorch forward (f32, HIGHEST)."""
    C = data.shape[1]
    ch = C // 2
    hi = jax.lax.Precision.HIGHEST
    x, y = data[:, :ch], data[:, ch:]
    h = jnp.maximum(x, 0.0)
    h = jnp.dot(h, p["wa"], precision=hi) + p["ba"]
    h = jnp.maximum(h, 0.0)
    posm = (jnp.dot(h, p["wp"], precision=hi) + p["bp"]) * p["pg"]
    negm = (jnp.dot(h, p["wn"], precision=hi) + p["bn"]) * p["ng"]
    a = jnp.dot(h, p["wadd"], precision=hi) + p["badd"]
    m = jnp.where(y >= 0.0, posm, negm)
    return jnp.concatenate([x, y * jnp.exp(m) + a], axis=1)


def make_normal_batch(size: int, batch_size: int, key) -> jax.Array:
    # MultivariateNormal(zeros, scale_tril=I) sample == standard normal draws.
    return jax.random.normal(key, (batch_size, size), dtype=jnp.float32)


def init_params(key, channels: int) -> dict:
    """Deterministic parameters (weights stored (in, out), i.e. torch W^T)."""
    ch = channels // 2
    ks = jax.random.split(key, 6)

    def linear(k, fan_in, fan_out):
        kw, kb = jax.random.split(k)
        bound = 1.0 / (fan_in ** 0.5)
        w = jax.random.uniform(kw, (fan_in, fan_out), jnp.float32, -bound, bound)
        b = jax.random.uniform(kb, (fan_out,), jnp.float32, -bound, bound)
        return w, b

    wa, ba = linear(ks[0], ch, channels)        # lina
    wp, bp = linear(ks[1], channels, ch)        # posmults
    wn, bn = linear(ks[2], channels, ch)        # negmults
    wd, bd = linear(ks[3], channels, ch)        # adds
    # Module initialises gates to zero; use small random values here so the
    # test actually exercises the gated / exp path.
    pg = 0.1 * jax.random.normal(ks[4], (ch,), jnp.float32)
    ng = 0.1 * jax.random.normal(ks[5], (ch,), jnp.float32)
    return dict(wa=wa, ba=ba, wp=wp, bp=bp, wn=wn, bn=bn,
                wadd=wd, badd=bd, pg=pg, ng=ng)


if __name__ == "__main__":
    # TODO(synk): `linb` is defined in the module but unused in forward();
    # `inverse()` (and its logdet) is not implemented here (forward-only).
    hparams = {"channels": 32, "batch_size": 8}

    key = jax.random.PRNGKey(0)
    k_data, k_par = jax.random.split(key)
    data = make_normal_batch(hparams["channels"], hparams["batch_size"], k_data)
    params = init_params(k_par, hparams["channels"])

    out = parametric_affine_forward(data, params)
    jax.block_until_ready(out)

    ref = parametric_affine_ref(data, params)
    assert out.shape == data.shape and out.dtype == data.dtype
    err = float(jnp.max(jnp.abs(out - ref)))
    # Documented tolerance: in-kernel f32 MXU matmuls vs HIGHEST reference.
    assert jnp.allclose(out, ref, atol=2e-4, rtol=2e-4), f"max abs err {err}"

    print("KERNEL_OK")
</pallas_src>

<mosaic_0001>
module attributes {stable_mosaic.version = 11 : i64} {
  func.func @_parametric_affine_kernel(%arg0: i32, %arg1: memref<8x128xf32, #tpu.memory_space<vmem>>, %arg2: memref<128x128xf32, #tpu.memory_space<vmem>>, %arg3: memref<1x128xf32, #tpu.memory_space<vmem>>, %arg4: memref<128x384xf32, #tpu.memory_space<vmem>>, %arg5: memref<1x384xf32, #tpu.memory_space<vmem>>, %arg6: memref<8x128xf32, #tpu.memory_space<vmem>>) attributes {dimension_semantics = [#tpu.dimension_semantics<parallel>], iteration_bounds = array<i64: 1>, scalar_prefetch = 0 : i64, scratch_operands = 0 : i64, tpu.core_type = #tpu.core_type<tc>, window_params = [{transform_indices = @transform_0, window_bounds = array<i64: 8, 128>}, {pipeline_mode = #tpu.pipeline_mode<synchronous>, transform_indices = @transform_1, window_bounds = array<i64: 128, 128>}, {pipeline_mode = #tpu.pipeline_mode<synchronous>, transform_indices = @transform_2, window_bounds = array<i64: 1, 128>}, {pipeline_mode = #tpu.pipeline_mode<synchronous>, transform_indices = @transform_3, window_bounds = array<i64: 128, 384>}, {pipeline_mode = #tpu.pipeline_mode<synchronous>, transform_indices = @transform_4, window_bounds = array<i64: 1, 384>}, {transform_indices = @transform_5, window_bounds = array<i64: 8, 128>}]} {
    %c0 = arith.constant 0 : index
    %c0_0 = arith.constant 0 : index
    %0 = vector.load %arg1[%c0, %c0_0] : memref<8x128xf32, #tpu.memory_space<vmem>>, vector<8x128xf32>
    %cst = arith.constant 0.000000e+00 : f32
    %1 = vector.broadcast %cst : f32 to vector<8x128xf32>
    %2 = arith.maximumf %0, %1 : vector<8x128xf32>
    %c0_1 = arith.constant 0 : index
    %c0_2 = arith.constant 0 : index
    %3 = vector.load %arg2[%c0_1, %c0_2] : memref<128x128xf32, #tpu.memory_space<vmem>>, vector<128x128xf32>
    %cst_3 = arith.constant dense<0.000000e+00> : vector<8x128xf32>
    %4 = tpu.matmul %2, %3, %cst_3 {dimension_numbers = #tpu.dot_dimension_numbers<[1], [0], [0], [1], [0, 0, 1, 1], [], []>} : vector<8x128xf32>, vector<128x128xf32>, vector<8x128xf32> -> vector<8x128xf32>
    %c0_4 = arith.constant 0 : index
    %c0_5 = arith.constant 0 : index
    %5 = vector.load %arg3[%c0_4, %c0_5] : memref<1x128xf32, #tpu.memory_space<vmem>>, vector<1x128xf32>
    %6 = vector.broadcast %5 : vector<1x128xf32> to vector<8x128xf32>
    %7 = arith.addf %4, %6 : vector<8x128xf32>
    %cst_6 = arith.constant 0.000000e+00 : f32
    %8 = vector.broadcast %cst_6 : f32 to vector<8x128xf32>
    %9 = arith.maximumf %7, %8 : vector<8x128xf32>
    %c0_7 = arith.constant 0 : index
    %c0_8 = arith.constant 0 : index
    %10 = vector.load %arg4[%c0_7, %c0_8] : memref<128x384xf32, #tpu.memory_space<vmem>>, vector<128x384xf32>
    %cst_9 = arith.constant dense<0.000000e+00> : vector<8x384xf32>
    %11 = tpu.matmul %9, %10, %cst_9 {dimension_numbers = #tpu.dot_dimension_numbers<[1], [0], [0], [1], [0, 0, 1, 1], [], []>} : vector<8x128xf32>, vector<128x384xf32>, vector<8x384xf32> -> vector<8x384xf32>
    %c0_10 = arith.constant 0 : index
    %c0_11 = arith.constant 0 : index
    %12 = vector.load %arg5[%c0_10, %c0_11] : memref<1x384xf32, #tpu.memory_space<vmem>>, vector<1x384xf32>
    %13 = vector.broadcast %12 : vector<1x384xf32> to vector<8x384xf32>
    %14 = arith.addf %11, %13 : vector<8x384xf32>
    %15 = vector.extract_strided_slice %14 {offsets = [0, 0], sizes = [8, 128], strides = [1, 1]} : vector<8x384xf32> to vector<8x128xf32>
    %16 = vector.extract_strided_slice %14 {offsets = [0, 128], sizes = [8, 128], strides = [1, 1]} : vector<8x384xf32> to vector<8x128xf32>
    %17 = vector.extract_strided_slice %14 {offsets = [0, 256], sizes = [8, 128], strides = [1, 1]} : vector<8x384xf32> to vector<8x128xf32>
    %cst_12 = arith.constant 0.000000e+00 : f32
    %18 = vector.broadcast %cst_12 : f32 to vector<8x128xf32>
    %19 = arith.cmpf oge, %0, %18 : vector<8x128xf32>
    %20 = arith.select %19, %15, %16 : vector<8x128xi1>, vector<8x128xf32>
    %21 = math.exp %20 : vector<8x128xf32>
    %22 = arith.mulf %0, %21 : vector<8x128xf32>
    %23 = arith.addf %22, %17 : vector<8x128xf32>
    %c0_13 = arith.constant 0 : index
    %c0_14 = arith.constant 0 : index
    %24 = vector.load %arg6[%c0_13, %c0_14] : memref<8x128xf32, #tpu.memory_space<vmem>>, vector<8x128xf32>
    tpu.vector_store %arg6[%c0_13, %c0_14], %23 {strides = array<i32>} : memref<8x128xf32, #tpu.memory_space<vmem>>, vector<8x128xf32>,
    return
  }
  func.func @transform_0(%arg0: i32) -> (i32, i32) {
    %c0_i32 = arith.constant 0 : i32
    %c0_i32_0 = arith.constant 0 : i32
    return %arg0, %c0_i32 : i32, i32
  }
  func.func @transform_1(%arg0: i32) -> (i32, i32) {
    %c0_i32 = arith.constant 0 : i32
    %c0_i32_0 = arith.constant 0 : i32
    %c0_i32_1 = arith.constant 0 : i32
    return %c0_i32, %c0_i32_0 : i32, i32
  }
  func.func @transform_2(%arg0: i32) -> (i32, i32) {
    %c0_i32 = arith.constant 0 : i32
    %c0_i32_0 = arith.constant 0 : i32
    %c0_i32_1 = arith.constant 0 : i32
    return %c0_i32, %c0_i32_0 : i32, i32
  }
  func.func @transform_3(%arg0: i32) -> (i32, i32) {
    %c0_i32 = arith.constant 0 : i32
    %c0_i32_0 = arith.constant 0 : i32
    %c0_i32_1 = arith.constant 0 : i32
    return %c0_i32, %c0_i32_0 : i32, i32
  }
  func.func @transform_4(%arg0: i32) -> (i32, i32) {
    %c0_i32 = arith.constant 0 : i32
    %c0_i32_0 = arith.constant 0 : i32
    %c0_i32_1 = arith.constant 0 : i32
    return %c0_i32, %c0_i32_0 : i32, i32
  }
  func.func @transform_5(%arg0: i32) -> (i32, i32) {
    %c0_i32 = arith.constant 0 : i32
    %c0_i32_0 = arith.constant 0 : i32
    return %arg0, %c0_i32 : i32, i32
  }
}

</mosaic_0001>

<llo_original>
// kernel: mul.28
$region0: #{mul.28}
  #allocation0 [shape = 's32[1]{0}', space=sflag, size = 0x4, scoped, tag = 'scoped memory for mul.28']
  %s0 = inlined_call_operand.vmem [shape: f32[16], index: 0, kind: input, shape index: {}]
  %s1 = inlined_call_operand.vmem [shape: f32[16], index: 1, kind: input, shape index: {}]
  %s2 = inlined_call_operand.vmem [shape: f32[16], index: 2, kind: output, shape index: {}]
  %v3 = vld [vmem:[%s0] sm:$0x1]
  %v4 = vld [vmem:[%s1] sm:$0x1]
  %5 = xla_tuple %v3, %v4
  %6 = xla_tuple %5
  %v7 = vmul.f32 %v3, %v4
  %8 = xla_tuple %v7
  %9 = vst [vmem:[%s2] sm:$0x1] %v7

// kernel: tile.28
$region0: #{tile.28}
  #allocation0 [shape = 's32[1]{0}', space=sflag, size = 0x4, scoped, tag = 'scoped memory for tile.28']
  %s0 = inlined_call_operand.vmem [shape: f32[32], index: 0, kind: input, shape index: {}]
  %s1 = inlined_call_operand.vmem [shape: f32[4,32], index: 1, kind: output, shape index: {}]
  // Predicated region
  $region2: #{tile.28} parent=0 // pred_check
    _
  $region3: #{tile.28} parent=0 // pred_check_branch
    %3 = sbr.rel (0) target = $region5
  $region4: #{tile.28} parent=0 // pred_region
    _
  $region5: #{tile.28} parent=0 // pred_fallthru
    _
  %v4 = vld [vmem:[%s0] ss:$0 sm:$0xff]
  %5 = vst [vmem:[%s1] sm:$0xf] %v4

// kernel: tile.29
$region0: #{tile.29}
  %s0 = inlined_call_operand.vmem [shape: f32[4,32], index: 0, kind: input, shape index: {}]
  %s1 = inlined_call_operand.vmem [shape: f32[128], index: 1, kind: output, shape index: {}]
  $region1: #{tile.29} parent=0
    #allocation0 [shape = 'u8[4096]{0}', space=vmem, size = 0x1000, scoped, tag = 'scoped mem for output reshape']
    #allocation1 [shape = 'u8[4096]{0}', space=vmem, size = 0x1000, scoped, tag = 'scoped mem for input reshape']
    %s3 = sshllo.u32 0, 4
    %v4 = vld [vmem:[%s0] sm:%s3]
    %5 = vst [vmem:[#allocation1] sm:%s3] %v4
    %v6 = vld [vmem:[#allocation1] sm:$0x1]
    %vm7 = vcmask 261120
    %8 = vst.msk [vmem:[#allocation0] sm:$0x1] %vm7, %v6
    %s9 = scalar_lea.vmem [#allocation1], 3
    %v10 = vld [vmem:[%s9] sm:$0x1]
    %11 = vrot.lane.b32.xlu0 %v10, 96
    %v12 = vpop.permute.xlu0 %11
    %vm13 = vcmask 1048320
    %14 = vst.msk [vmem:[#allocation0] sm:$0x1] %vm13, %v12
    %s15 = scalar_lea.vmem [#allocation1], 2
    %v16 = vld [vmem:[%s15] sm:$0x1]
    %17 = vrot.lane.b32.xlu0 %v16, 64
    %v18 = vpop.permute.xlu0 %17
    %vm19 = vcmask 785920
    %20 = vst.msk [vmem:[#allocation0] sm:$0x1] %vm19, %v18
    %s21 = scalar_lea.vmem [#allocation1], 1
    %v22 = vld [vmem:[%s21] sm:$0x1]
    %23 = vrot.lane.b32.xlu0 %v22, 32
    %v24 = vpop.permute.xlu0 %23
    %vm25 = vcmask 523520
    %26 = vst.msk [vmem:[#allocation0] sm:$0x1] %vm25, %v24
    %s28 = sshllo.u32 0, 1
    %v30 = vld [vmem:[#allocation0] sm:%s28]
    %s31 = sshllo.u32 0, 1
    %32 = vst [vmem:[%s1] sm:%s31] %v30

// kernel: tile.24
$region0: #{tile.24}
  %s0 = inlined_call_operand.vmem [shape: f32[4,32], index: 0, kind: input, shape index: {}]
  %s1 = inlined_call_operand.vmem [shape: f32[1,128], index: 1, kind: output, shape index: {}]
  $region1: #{tile.24} parent=0
    #allocation0 [shape = 'u8[4096]{0}', space=vmem, size = 0x1000, scoped, tag = 'scoped mem for output reshape']
    #allocation1 [shape = 'u8[4096]{0}', space=vmem, size = 0x1000, scoped, tag = 'scoped mem for input reshape']
    %s3 = sshllo.u32 0, 4
    %v4 = vld [vmem:[%s0] sm:%s3]
    %5 = vst [vmem:[#allocation1] sm:%s3] %v4
    %v6 = vld [vmem:[#allocation1] sm:$0x1]
    %vm7 = vcmask 261120
    %8 = vst.msk [vmem:[#allocation0] sm:$0x1] %vm7, %v6
    %s9 = scalar_lea.vmem [#allocation1], 3
    %v10 = vld [vmem:[%s9] sm:$0x1]
    %11 = vrot.lane.b32.xlu0 %v10, 96
    %v12 = vpop.permute.xlu0 %11
    %vm13 = vcmask 1048320
    %14 = vst.msk [vmem:[#allocation0] sm:$0x1] %vm13, %v12
    %s15 = scalar_lea.vmem [#allocation1], 2
    %v16 = vld [vmem:[%s15] sm:$0x1]
    %17 = vrot.lane.b32.xlu0 %v16, 64
    %v18 = vpop.permute.xlu0 %17
    %vm19 = vcmask 785920
    %20 = vst.msk [vmem:[#allocation0] sm:$0x1] %vm19, %v18
    %s21 = scalar_lea.vmem [#allocation1], 1
    %v22 = vld [vmem:[%s21] sm:$0x1]
    %23 = vrot.lane.b32.xlu0 %v22, 32
    %v24 = vpop.permute.xlu0 %23
    %vm25 = vcmask 523520
    %26 = vst.msk [vmem:[#allocation0] sm:$0x1] %vm25, %v24
    %s28 = sshllo.u32 0, 1
    %v30 = vld [vmem:[#allocation0] sm:%s28]
    %s31 = sshllo.u32 0, 1
    %32 = vst [vmem:[%s1] sm:%s31] %v30

// kernel: parametric_affine_forward.1
$region0: #{parametric_affine_forward.1}
  #allocation0 [shape = 'u32[]', space=smem, size = 0x4, offset = 0x4, fixed_abs, tag = 'smem constant byte address 0x4 - core index']
  #allocation1 [shape = 'u32[144,128]{1,0:T(1,128)}', space=vmem, size = 0x12000, scoped, tag = 'internal scratch']
  %s0 = inlined_call_operand.vmem [shape: f32[8,128], index: 0, kind: input, shape index: {}]
  %s1 = inlined_call_operand.vmem [shape: f32[128,128], index: 1, kind: input, shape index: {}]
  %s2 = inlined_call_operand.vmem [shape: f32[1,128], index: 2, kind: input, shape index: {}]
  %s3 = inlined_call_operand.vmem [shape: f32[128,384], index: 3, kind: input, shape index: {}]
  %s4 = inlined_call_operand.vmem [shape: f32[1,384], index: 4, kind: input, shape index: {}]
  %s5 = inlined_call_operand.vmem [shape: f32[8,128], index: 5, kind: output, shape index: {}]
  %s6 = sld [smem:[#allocation0]]
  $region30: #{parametric_affine_forward.1} parent=0
    _
  %s8 = ssub.s32 1, %s6
  %s9 = scalar_select 0, %s8, %s6
  // Predicated region
  $region2: #{parametric_affine_forward.1} parent=0 // pred_check
    _
  $region3: #{parametric_affine_forward.1} parent=0 // pred_check_branch
    %11 = sbr.rel (0) target = $region5
  $region4: #{parametric_affine_forward.1} parent=0 // pred_region
    _
  $region5: #{parametric_affine_forward.1} parent=0 // pred_fallthru
    _
  // Predicated region
  $region6: #{parametric_affine_forward.1} parent=0 // pred_check
    _
  $region7: #{parametric_affine_forward.1} parent=0 // pred_check_branch
    %13 = sbr.rel (0) target = $region9
  $region8: #{parametric_affine_forward.1} parent=0 // pred_region
    _
  $region9: #{parametric_affine_forward.1} parent=0 // pred_fallthru
    _
  // Predicated region
  $region10: #{parametric_affine_forward.1} parent=0 // pred_check
    _
  $region11: #{parametric_affine_forward.1} parent=0 // pred_check_branch
    %15 = sbr.rel (0) target = $region13
  $region12: #{parametric_affine_forward.1} parent=0 // pred_region
    _
  $region13: #{parametric_affine_forward.1} parent=0 // pred_fallthru
    _
  // Predicated region
  $region14: #{parametric_affine_forward.1} parent=0 // pred_check
    _
  $region15: #{parametric_affine_forward.1} parent=0 // pred_check_branch
    %17 = sbr.rel (0) target = $region17
  $region16: #{parametric_affine_forward.1} parent=0 // pred_region
    _
  $region17: #{parametric_affine_forward.1} parent=0 // pred_fallthru
    _
  // Predicated region
  $region18: #{parametric_affine_forward.1} parent=0 // pred_check
    _
  $region19: #{parametric_affine_forward.1} parent=0 // pred_check_branch
    %19 = sbr.rel (0) target = $region21
  $region20: #{parametric_affine_forward.1} parent=0 // pred_region
    _
  $region21: #{parametric_affine_forward.1} parent=0 // pred_fallthru
    _
  %v20 = vld [vmem:[%s0] sm:$0xff]
  %v21 = vmax.f32 %v20, 0.0
  %v22 = vld [vmem:[%s1] sm:$0xff]
  %v23 = vld [vmem:[%s1 + $0x8] sm:$0xff]
  %v24 = vld [vmem:[%s1 + $0x10] sm:$0xff]
  %v25 = vld [vmem:[%s1 + $0x18] sm:$0xff]
  %v26 = vld [vmem:[%s1 + $0x20] sm:$0xff]
  %v27 = vld [vmem:[%s1 + $0x28] sm:$0xff]
  %v28 = vld [vmem:[%s1 + $0x30] sm:$0xff]
  %v29 = vld [vmem:[%s1 + $0x38] sm:$0xff]
  %v30 = vld [vmem:[%s1 + $0x40] sm:$0xff]
  %v31 = vld [vmem:[%s1 + $0x48] sm:$0xff]
  %v32 = vld [vmem:[%s1 + $0x50] sm:$0xff]
  %v33 = vld [vmem:[%s1 + $0x58] sm:$0xff]
  %v34 = vld [vmem:[%s1 + $0x60] sm:$0xff]
  %v35 = vld [vmem:[%s1 + $0x68] sm:$0xff]
  %v36 = vld [vmem:[%s1 + $0x70] sm:$0xff]
  %v37 = vld [vmem:[%s1 + $0x78] sm:$0xff]
  %v38 = vld [vmem:[%s2] sm:$0x1]
  %v40 = vlaneseq
  %v41 = vshrl.u32 %v40, 7
  %v42 = vsub.s32 0, %v41
  %v43 = vrot.slane %v38, %v42
  %45 = vmatprep.subr.mxu0 0.0
  %46 = vmatpush1.msra.mxu0 %v22
  %47 = vmatprep.subr.mxu0 0.0
  %48 = vmatpush1.msra.mxu0 %v23
  %49 = vmatprep.subr.mxu0 0.0
  %50 = vmatpush1.msra.mxu0 %v24
  %51 = vmatprep.subr.mxu0 0.0
  %52 = vmatpush1.msra.mxu0 %v25
  %53 = vmatprep.subr.mxu0 0.0
  %54 = vmatpush1.msra.mxu0 %v26
  %55 = vmatprep.subr.mxu0 0.0
  %56 = vmatpush1.msra.mxu0 %v27
  %57 = vmatprep.subr.mxu0 0.0
  %58 = vmatpush1.msra.mxu0 %v28
  %59 = vmatprep.subr.mxu0 0.0
  %60 = vmatpush1.msra.mxu0 %v29
  %61 = vmatprep.subr.mxu0 0.0
  %62 = vmatpush1.msra.mxu0 %v30
  %63 = vmatprep.subr.mxu0 0.0
  %64 = vmatpush1.msra.mxu0 %v31
  %65 = vmatprep.subr.mxu0 0.0
  %66 = vmatpush1.msra.mxu0 %v32
  %67 = vmatprep.subr.mxu0 0.0
  %68 = vmatpush1.msra.mxu0 %v33
  %69 = vmatprep.subr.mxu0 0.0
  %70 = vmatpush1.msra.mxu0 %v34
  %71 = vmatprep.subr.mxu0 0.0
  %72 = vmatpush1.msra.mxu0 %v35
  %73 = vmatprep.subr.mxu0 0.0
  %74 = vmatpush1.msra.mxu0 %v36
  %75 = vmatprep.subr.mxu0 0.0
  %76 = vmatpush1.msra.mxu0 %v37
  %77 = vmatprep.subr.mxu0 0.0
  %78 = vmatpush1.msra.mxu0 0.0
  %79 = vmatprep.subr.mxu0 0.0
  %80 = vmatpush1.msra.mxu0 0.0
  %81 = vmatprep.subr.mxu0 0.0
  %82 = vmatpush1.msra.mxu0 0.0
  %83 = vmatprep.subr.mxu0 0.0
  %84 = vmatpush1.msra.mxu0 0.0
  %85 = vmatprep.subr.mxu0 0.0
  %86 = vmatpush1.msra.mxu0 0.0
  %87 = vmatprep.subr.mxu0 0.0
  %88 = vmatpush1.msra.mxu0 0.0
  %89 = vmatprep.subr.mxu0 0.0
  %90 = vmatpush1.msra.mxu0 0.0
  %91 = vmatprep.subr.mxu0 0.0
  %92 = vmatpush1.msra.mxu0 0.0
  %93 = vmatprep.subr.mxu0 0.0
  %94 = vmatpush1.msra.mxu0 0.0
  %95 = vmatprep.subr.mxu0 0.0
  %96 = vmatpush1.msra.mxu0 0.0
  %97 = vmatprep.subr.mxu0 0.0
  %98 = vmatpush1.msra.mxu0 0.0
  %99 = vmatprep.subr.mxu0 0.0
  %100 = vmatpush1.msra.mxu0 0.0
  %101 = vmatprep.subr.mxu0 0.0
  %102 = vmatpush1.msra.mxu0 0.0
  %103 = vmatprep.subr.mxu0 0.0
  %104 = vmatpush1.msra.mxu0 0.0
  %105 = vmatprep.subr.mxu0 0.0
  %106 = vmatpush1.msra.mxu0 0.0
  %107 = vmatprep.subr.mxu0 0.0
  %108 = vmatpush1.msra.mxu0 0.0
  %109 = vmatprep.mubr.f32.mxu0 0.0
  %110 = vmatmul.mubr.f32.gmra.mrb[0].mxu0 %v21
  %v111 = vpop.f32.mrb[0].mxu0
  %v112 = vadd.f32 %v43, %v111
  %v113 = vpop.f32.mrb[0].mxu0
  %114 = vdwg.mxu0
  %v115 = vmax.f32 %v112, 0.0
  %v116 = vld [vmem:[%s3] sm:$0xff]
  %v117 = vld [vmem:[%s3 + $0x8] sm:$0xff]
  %v118 = vld [vmem:[%s3 + $0x10] sm:$0xff]
  %v119 = vld [vmem:[%s3 + $0x18] sm:$0xff]
  %v120 = vld [vmem:[%s3 + $0x20] sm:$0xff]
  %v121 = vld [vmem:[%s3 + $0x28] sm:$0xff]
  %v122 = vld [vmem:[%s3 + $0x30] sm:$0xff]
  %v123 = vld [vmem:[%s3 + $0x38] sm:$0xff]
  %v124 = vld [vmem:[%s3 + $0x40] sm:$0xff]
  %v125 = vld [vmem:[%s3 + $0x48] sm:$0xff]
  %v126 = vld [vmem:[%s3 + $0x50] sm:$0xff]
  %v127 = vld [vmem:[%s3 + $0x58] sm:$0xff]
  %v128 = vld [vmem:[%s3 + $0x60] sm:$0xff]
  %v129 = vld [vmem:[%s3 + $0x68] sm:$0xff]
  %v130 = vld [vmem:[%s3 + $0x70] sm:$0xff]
  %v131 = vld [vmem:[%s3 + $0x78] sm:$0xff]
  %v132 = vld [vmem:[%s3 + $0x80] sm:$0xff]
  %v133 = vld [vmem:[%s3 + $0x88] sm:$0xff]
  %v134 = vld [vmem:[%s3 + $0x90] sm:$0xff]
  %v135 = vld [vmem:[%s3 + $0x98] sm:$0xff]
  %v136 = vld [vmem:[%s3 + $0xa0] sm:$0xff]
  %v137 = vld [vmem:[%s3 + $0xa8] sm:$0xff]
  %v138 = vld [vmem:[%s3 + $0xb0] sm:$0xff]
  %v139 = vld [vmem:[%s3 + $0xb8] sm:$0xff]
  %v140 = vld [vmem:[%s3 + $0xc0] sm:$0xff]
  %v141 = vld [vmem:[%s3 + $0xc8] sm:$0xff]
  %v142 = vld [vmem:[%s3 + $0xd0] sm:$0xff]
  %v143 = vld [vmem:[%s3 + $0xd8] sm:$0xff]
  %v144 = vld [vmem:[%s3 + $0xe0] sm:$0xff]
  %v145 = vld [vmem:[%s3 + $0xe8] sm:$0xff]
  %v146 = vld [vmem:[%s3 + $0xf0] sm:$0xff]
  %v147 = vld [vmem:[%s3 + $0xf8] sm:$0xff]
  %v148 = vld [vmem:[%s3 + $0x100] sm:$0xff]
  %v149 = vld [vmem:[%s3 + $0x108] sm:$0xff]
  %v150 = vld [vmem:[%s3 + $0x110] sm:$0xff]
  %v151 = vld [vmem:[%s3 + $0x118] sm:$0xff]
  %v152 = vld [vmem:[%s3 + $0x120] sm:$0xff]
  %v153 = vld [vmem:[%s3 + $0x128] sm:$0xff]
  %v154 = vld [vmem:[%s3 + $0x130] sm:$0xff]
  %v155 = vld [vmem:[%s3 + $0x138] sm:$0xff]
  %v156 = vld [vmem:[%s3 + $0x140] sm:$0xff]
  %v157 = vld [vmem:[%s3 + $0x148] sm:$0xff]
  %v158 = vld [vmem:[%s3 + $0x150] sm:$0xff]
  %v159 = vld [vmem:[%s3 + $0x158] sm:$0xff]
  %v160 = vld [vmem:[%s3 + $0x160] sm:$0xff]
  %v161 = vld [vmem:[%s3 + $0x168] sm:$0xff]
  %v162 = vld [vmem:[%s3 + $0x170] sm:$0xff]
  %v163 = vld [vmem:[%s3 + $0x178] sm:$0xff]
  %v164 = vld [vmem:[%s4] sm:$0x7]
  %v166 = vlaneseq
  %v167 = vshrl.u32 %v166, 7
  %v168 = vsub.s32 0, %v167
  %v169 = vrot.slane %v164, %v168
  %v170 = vlaneseq
  %v171 = vshrl.u32 %v170, 7
  %v172 = vsub.s32 1, %v171
  %v173 = vrot.slane %v164, %v172
  %v174 = vlaneseq
  %v175 = vshrl.u32 %v174, 7
  %v176 = vsub.s32 2, %v175
  %v177 = vrot.slane %v164, %v176
  %181 = vmatprep.subr.mxu0 %v117
  %182 = vmatpush1.msra.mxu0 %v116
  %183 = vmatprep.subr.mxu0 %v120
  %184 = vmatpush1.msra.mxu0 %v119
  %185 = vmatprep.subr.mxu0 %v123
  %186 = vmatpush1.msra.mxu0 %v122
  %187 = vmatprep.subr.mxu0 %v126
  %188 = vmatpush1.msra.mxu0 %v125
  %189 = vmatprep.subr.mxu0 %v129
  %190 = vmatpush1.msra.mxu0 %v128
  %191 = vmatprep.subr.mxu0 %v132
  %192 = vmatpush1.msra.mxu0 %v131
  %193 = vmatprep.subr.mxu0 %v135
  %194 = vmatpush1.msra.mxu0 %v134
  %195 = vmatprep.subr.mxu0 %v138
  %196 = vmatpush1.msra.mxu0 %v137
  %197 = vmatprep.subr.mxu0 %v141
  %198 = vmatpush1.msra.mxu0 %v140
  %199 = vmatprep.subr.mxu0 %v144
  %200 = vmatpush1.msra.mxu0 %v143
  %201 = vmatprep.subr.mxu0 %v147
  %202 = vmatpush1.msra.mxu0 %v146
  %203 = vmatprep.subr.mxu0 %v150
  %204 = vmatpush1.msra.mxu0 %v149
  %205 = vmatprep.subr.mxu0 %v153
  %206 = vmatpush1.msra.mxu0 %v152
  %207 = vmatprep.subr.mxu0 %v156
  %208 = vmatpush1.msra.mxu0 %v155
  %209 = vmatprep.subr.mxu0 %v159
  %210 = vmatpush1.msra.mxu0 %v158
  %211 = vmatprep.subr.mxu0 %v162
  %212 = vmatpush1.msra.mxu0 %v161
  %213 = vmatprep.subr.mxu0 0.0
  %214 = vmatpush1.msra.mxu0 0.0
  %215 = vmatprep.subr.mxu0 0.0
  %216 = vmatpush1.msra.mxu0 0.0
  %217 = vmatprep.subr.mxu0 0.0
  %218 = vmatpush1.msra.mxu0 0.0
  %219 = vmatprep.subr.mxu0 0.0
  %220 = vmatpush1.msra.mxu0 0.0
  %221 = vmatprep.subr.mxu0 0.0
  %222 = vmatpush1.msra.mxu0 0.0
  %223 = vmatprep.subr.mxu0 0.0
  %224 = vmatpush1.msra.mxu0 0.0
  %225 = vmatprep.subr.mxu0 0.0
  %226 = vmatpush1.msra.mxu0 0.0
  %227 = vmatprep.subr.mxu0 0.0
  %228 = vmatpush1.msra.mxu0 0.0
  %229 = vmatprep.subr.mxu0 0.0
  %230 = vmatpush1.msra.mxu0 0.0
  %231 = vmatprep.subr.mxu0 0.0
  %232 = vmatpush1.msra.mxu0 0.0
  %233 = vmatprep.subr.mxu0 0.0
  %234 = vmatpush1.msra.mxu0 0.0
  %235 = vmatprep.subr.mxu0 0.0
  %236 = vmatpush1.msra.mxu0 0.0
  %237 = vmatprep.subr.mxu0 0.0
  %238 = vmatpush1.msra.mxu0 0.0
  %239 = vmatprep.subr.mxu0 0.0
  %240 = vmatpush1.msra.mxu0 0.0
  %241 = vmatprep.subr.mxu0 0.0
  %242 = vmatpush1.msra.mxu0 0.0
  %243 = vmatprep.subr.mxu0 0.0
  %244 = vmatpush1.msra.mxu0 0.0
  %245 = vmatprep.mubr.f32.mxu0 0.0
  %246 = vmatmul.mubr.f32.gmra.mrb[0].mxu0 %v115
  %v247 = vpop.f32.mrb[0].mxu0
  %v248 = vadd.f32 %v169, %v247
  %v249 = vpop.f32.mrb[0].mxu0
  %v250 = vadd.f32 %v173, %v249
  %251 = vdwg.mxu0
  %252 = vmatprep.subr.mxu0 0.0
  %253 = vmatpush1.msra.mxu0 %v118
  %254 = vmatprep.subr.mxu0 0.0
  %255 = vmatpush1.msra.mxu0 %v121
  %256 = vmatprep.subr.mxu0 0.0
  %257 = vmatpush1.msra.mxu0 %v124
  %258 = vmatprep.subr.mxu0 0.0
  %259 = vmatpush1.msra.mxu0 %v127
  %260 = vmatprep.subr.mxu0 0.0
  %261 = vmatpush1.msra.mxu0 %v130
  %262 = vmatprep.subr.mxu0 0.0
  %263 = vmatpush1.msra.mxu0 %v133
  %264 = vmatprep.subr.mxu0 0.0
  %265 = vmatpush1.msra.mxu0 %v136
  %266 = vmatprep.subr.mxu0 0.0
  %267 = vmatpush1.msra.mxu0 %v139
  %268 = vmatprep.subr.mxu0 0.0
  %269 = vmatpush1.msra.mxu0 %v142
  %270 = vmatprep.subr.mxu0 0.0
  %271 = vmatpush1.msra.mxu0 %v145
  %272 = vmatprep.subr.mxu0 0.0
  %273 = vmatpush1.msra.mxu0 %v148
  %274 = vmatprep.subr.mxu0 0.0
  %275 = vmatpush1.msra.mxu0 %v151
  %276 = vmatprep.subr.mxu0 0.0
  %277 = vmatpush1.msra.mxu0 %v154
  %278 = vmatprep.subr.mxu0 0.0
  %279 = vmatpush1.msra.mxu0 %v157
  %280 = vmatprep.subr.mxu0 0.0
  %281 = vmatpush1.msra.mxu0 %v160
  %282 = vmatprep.subr.mxu0 0.0
  %283 = vmatpush1.msra.mxu0 %v163
  %284 = vmatprep.subr.mxu0 0.0
  %285 = vmatpush1.msra.mxu0 0.0
  %286 = vmatprep.subr.mxu0 0.0
  %287 = vmatpush1.msra.mxu0 0.0
  %288 = vmatprep.subr.mxu0 0.0
  %289 = vmatpush1.msra.mxu0 0.0
  %290 = vmatprep.subr.mxu0 0.0
  %291 = vmatpush1.msra.mxu0 0.0
  %292 = vmatprep.subr.mxu0 0.0
  %293 = vmatpush1.msra.mxu0 0.0
  %294 = vmatprep.subr.mxu0 0.0
  %295 = vmatpush1.msra.mxu0 0.0
  %296 = vmatprep.subr.mxu0 0.0
  %297 = vmatpush1.msra.mxu0 0.0
  %298 = vmatprep.subr.mxu0 0.0
  %299 = vmatpush1.msra.mxu0 0.0
  %300 = vmatprep.subr.mxu0 0.0
  %301 = vmatpush1.msra.mxu0 0.0
  %302 = vmatprep.subr.mxu0 0.0
  %303 = vmatpush1.msra.mxu0 0.0
  %304 = vmatprep.subr.mxu0 0.0
  %305 = vmatpush1.msra.mxu0 0.0
  %306 = vmatprep.subr.mxu0 0.0
  %307 = vmatpush1.msra.mxu0 0.0
  %308 = vmatprep.subr.mxu0 0.0
  %309 = vmatpush1.msra.mxu0 0.0
  %310 = vmatprep.subr.mxu0 0.0
  %311 = vmatpush1.msra.mxu0 0.0
  %312 = vmatprep.subr.mxu0 0.0
  %313 = vmatpush1.msra.mxu0 0.0
  %314 = vmatprep.subr.mxu0 0.0
  %315 = vmatpush1.msra.mxu0 0.0
  %316 = vmatprep.mubr.f32.mxu0 0.0
  %317 = vmatmul.mubr.f32.gmra.mrb[0].mxu0 %v115
  %v318 = vpop.f32.mrb[0].mxu0
  %v319 = vadd.f32 %v177, %v318
  %v320 = vpop.f32.mrb[0].mxu0
  %321 = vdwg.mxu0
  %vm322 = vcmp.ge.f32.partialorder %v20, 0.0
  %v323 = vsel %vm322, %v248, %v250
  %v324 = vmul.f32 %v323, 1.442695
  %v325 = vpow.pop %v324
  %v326 = vmul.f32 %v20, %v325
  %v327 = vadd.f32 %v326, %v319
  %328 = vst [vmem:[%s5] sm:$0xff] %v327
  // Predicated region
  $region22: #{parametric_affine_forward.1} parent=0 // pred_check
    _
  $region23: #{parametric_affine_forward.1} parent=0 // pred_check_branch
    %330 = sbr.rel (0) target = $region25
  $region24: #{parametric_affine_forward.1} parent=0 // pred_region
    _
  $region25: #{parametric_affine_forward.1} parent=0 // pred_fallthru
    _
  // Predicated region
  $region26: #{parametric_affine_forward.1} parent=0 // pred_check
    _
  $region27: #{parametric_affine_forward.1} parent=0 // pred_check_branch
    %332 = sbr.rel (0) target = $region29
  $region28: #{parametric_affine_forward.1} parent=0 // pred_region
    _
  $region29: #{parametric_affine_forward.1} parent=0 // pred_fallthru
    _

</llo_original>
